<compile_context>
chip_gen: v6e
topology: v6e:2x2x1
jax: 0.10.0
libtpu: 0.0.40
codegen_flags: <defaults>
</compile_context>

<pallas_src>
import functools

import jax
import jax.numpy as jnp
from jax.experimental import pallas as pl
from jax.experimental.pallas import tpu as pltpu

_LANE = 128


def _round_up(x, m):
    return ((x + m - 1) // m) * m


# ---------------------------------------------------------------------------
# Kernels
# ---------------------------------------------------------------------------
def _encoder_fused_kernel(a_ref, x_ref, w1_ref, b1_ref, w2_ref, b2_ref,
                          o_ref, z_buf):
    """All GIN layers in one kernel; grid axis = layer index ('arbitrary').

    a_ref : (Np, Np) bf16  dense A + I (constant block -> DMA'd once)
    x_ref : (Np, P)  f32   padded input features (constant block)
    w1/w2 : (P, P)   f32   per-layer MLP weights (streamed per grid step)
    b1/b2 : (1, P)   f32   per-layer biases
    o_ref : (Np, P)  f32   final node embeddings (resident output block)
    z_buf : (Np, P)  f32   VMEM scratch carrying z across layers
    """
    layer = pl.program_id(0)

    @pl.when(layer == 0)
    def _():
        z_buf[...] = x_ref[...]

    z = z_buf[...]
    # Sum aggregation + self term: (A + I) @ z, bf16 operands, f32 accumulate.
    agg = jnp.dot(a_ref[...], z.astype(jnp.bfloat16),
                  preferred_element_type=jnp.float32)
    # GIN internal MLP: Linear -> ReLU -> Linear, then Encoder ReLU.
    h1 = jnp.dot(agg, w1_ref[...], preferred_element_type=jnp.float32) + b1_ref[...]
    h1 = jnp.maximum(h1, 0.0)
    h2 = jnp.dot(h1, w2_ref[...], preferred_element_type=jnp.float32) + b2_ref[...]
    z_new = jnp.maximum(h2, 0.0)
    z_buf[...] = z_new

    @pl.when(layer == pl.num_programs(0) - 1)
    def _():
        o_ref[...] = z_new


def _gin_layer_tiled_kernel(a_ref, z_ref, w1_ref, b1_ref, w2_ref, b2_ref, o_ref):
    """One GIN layer, tiled over node-row blocks ('parallel' grid axis).

    a_ref : (TILE_N, Np) bf16  row block of dense A + I
    z_ref : (Np, P)      f32   full node features (constant block)
    o_ref : (TILE_N, P)  f32   output row block
    """
    agg = jnp.dot(a_ref[...], z_ref[...].astype(jnp.bfloat16),
                  preferred_element_type=jnp.float32)
    h1 = jnp.dot(agg, w1_ref[...], preferred_element_type=jnp.float32) + b1_ref[...]
    h1 = jnp.maximum(h1, 0.0)
    h2 = jnp.dot(h1, w2_ref[...], preferred_element_type=jnp.float32) + b2_ref[...]
    o_ref[...] = jnp.maximum(h2, 0.0)


# ---------------------------------------------------------------------------
# pallas_call wrappers
# ---------------------------------------------------------------------------
def _encoder_fused_call(a_hat, x_pad, w1_all, b1_all, w2_all, b2_all):
    n_pad = a_hat.shape[0]
    p = w1_all.shape[-1]
    num_layers = w1_all.shape[0]

    vmem_est = (2 * n_pad * n_pad * 2          # A_hat bf16 (buffered)
                + 4 * n_pad * p * 4            # x, z scratch, out (f32)
                + 2 * 2 * (2 * p * p + 2 * p) * 4)  # double-buffered weights
    vmem_limit = int(min(64 * 1024 * 1024, max(32 * 1024 * 1024, 2 * vmem_est)))

    return pl.pallas_call(
        _encoder_fused_kernel,
        out_shape=jax.ShapeDtypeStruct((n_pad, p), jnp.float32),
        grid_spec=pltpu.PrefetchScalarGridSpec(
            num_scalar_prefetch=0,
            grid=(num_layers,),
            in_specs=[
                pl.BlockSpec((n_pad, n_pad), lambda l: (0, 0)),   # A_hat
                pl.BlockSpec((n_pad, p), lambda l: (0, 0)),       # x
                pl.BlockSpec((None, p, p), lambda l: (l, 0, 0)),  # W1[l]
                pl.BlockSpec((None, 1, p), lambda l: (l, 0, 0)),  # b1[l]
                pl.BlockSpec((None, p, p), lambda l: (l, 0, 0)),  # W2[l]
                pl.BlockSpec((None, 1, p), lambda l: (l, 0, 0)),  # b2[l]
            ],
            out_specs=pl.BlockSpec((n_pad, p), lambda l: (0, 0)),
            scratch_shapes=[pltpu.VMEM((n_pad, p), jnp.float32)],
        ),
        compiler_params=pltpu.CompilerParams(
            dimension_semantics=("arbitrary",),
            vmem_limit_bytes=vmem_limit,
        ),
    )(a_hat, x_pad, w1_all, b1_all, w2_all, b2_all)


def _gin_layer_tiled_call(a_hat, z, w1, b1, w2, b2, *, tile_n):
    n_pad = a_hat.shape[0]
    p = w1.shape[-1]
    grid = (n_pad // tile_n,)

    vmem_est = (2 * tile_n * n_pad * 2         # double-buffered A row blocks
                + 2 * n_pad * p * 4            # z (full)
                + 2 * tile_n * p * 4           # output block
                + 2 * 2 * (p * p + p) * 4)     # weights/biases
    vmem_limit = int(min(64 * 1024 * 1024, max(32 * 1024 * 1024, 2 * vmem_est)))

    return pl.pallas_call(
        _gin_layer_tiled_kernel,
        out_shape=jax.ShapeDtypeStruct((n_pad, p), jnp.float32),
        grid_spec=pltpu.PrefetchScalarGridSpec(
            num_scalar_prefetch=0,
            grid=grid,
            in_specs=[
                pl.BlockSpec((tile_n, n_pad), lambda i: (i, 0)),  # A_hat rows
                pl.BlockSpec((n_pad, p), lambda i: (0, 0)),       # z (full)
                pl.BlockSpec((p, p), lambda i: (0, 0)),           # W1
                pl.BlockSpec((1, p), lambda i: (0, 0)),           # b1
                pl.BlockSpec((p, p), lambda i: (0, 0)),           # W2
                pl.BlockSpec((1, p), lambda i: (0, 0)),           # b2
            ],
            out_specs=pl.BlockSpec((tile_n, p), lambda i: (i, 0)),
        ),
        compiler_params=pltpu.CompilerParams(
            dimension_semantics=("parallel",),
            vmem_limit_bytes=vmem_limit,
        ),
    )(a_hat, z, w1, b1, w2, b2)


# ---------------------------------------------------------------------------
# Parameter / input preparation
# ---------------------------------------------------------------------------
def _init_linear(key, fan_in, fan_out):
    """Deterministic init mimicking nn.Linear's uniform(-1/sqrt(fan_in), ...)."""
    k_w, k_b = jax.random.split(key)
    bound = 1.0 / jnp.sqrt(fan_in)
    w = jax.random.uniform(k_w, (fan_in, fan_out), jnp.float32, -bound, bound)
    b = jax.random.uniform(k_b, (1, fan_out), jnp.float32, -bound, bound)
    return w, b


def init_encoder_params(key, input_dim, hidden_dim, num_layers):
    params = []
    in_dim = input_dim
    for _ in range(num_layers):
        key, k1, k2 = jax.random.split(key, 3)
        w1, b1 = _init_linear(k1, in_dim, hidden_dim)
        w2, b2 = _init_linear(k2, hidden_dim, hidden_dim)
        params.append((w1, b1, w2, b2))
        in_dim = hidden_dim
    return params


def _pad2d(a, rows, cols):
    return jnp.pad(a, ((0, rows - a.shape[0]), (0, cols - a.shape[1])))


def _pad_and_stack_params(params, p):
    """Zero-pad every Linear to (p, p)/(1, p) and stack over layers.

    Zero padding keeps semantics exact: padded feature columns stay identically
    zero through every layer (zero weight cols/rows + zero bias + ReLU).
    """
    w1s = jnp.stack([_pad2d(w1, p, p) for (w1, _, _, _) in params])
    b1s = jnp.stack([_pad2d(b1, 1, p) for (_, b1, _, _) in params])
    w2s = jnp.stack([_pad2d(w2, p, p) for (_, _, w2, _) in params])
    b2s = jnp.stack([_pad2d(b2, 1, p) for (_, _, _, b2) in params])
    return w1s, b1s, w2s, b2s


def dense_adjacency_hat(edge_index, num_nodes, n_pad):
    """A_hat[i, j] = (#edges j -> i) + [i == j], padded to (n_pad, n_pad), bf16.

    The identity folds the GIN (1+eps)*x self term (eps=0) into the single
    aggregation matmul. Multi-edge counts accumulate in f32 before the bf16
    cast (exact for counts <= 256, matching PyG sum aggregation).
    """
    src, dst = edge_index[0], edge_index[1]
    adj = jnp.zeros((n_pad, n_pad), jnp.float32)
    adj = adj.at[dst, src].add(1.0)
    diag = jnp.arange(num_nodes)
    adj = adj.at[diag, diag].add(1.0)
    return adj.astype(jnp.bfloat16)


# ---------------------------------------------------------------------------
# Public forward
# ---------------------------------------------------------------------------
@functools.partial(jax.jit, static_argnames=("num_nodes", "mode", "tile_n"))
def encoder_forward(params, x, edge_index, num_nodes, mode="auto", tile_n=256):
    input_dim = x.shape[1]
    hidden_dim = params[0][0].shape[1]
    num_layers = len(params)
    p = _round_up(max(input_dim, hidden_dim), _LANE)

    if mode == "auto":
        # Fuse all layers if the VMEM residents (bf16 A_hat + f32 x/z/out)
        # comfortably fit the scoped-VMEM budget; otherwise stream row tiles.
        n_fused = _round_up(num_nodes, 8)
        resident = n_fused * n_fused * 2 + 3 * n_fused * p * 4
        mode = "fused" if resident <= 24 * 1024 * 1024 else "tiled"

    if mode == "fused":
        n_pad = _round_up(num_nodes, 8)
    else:
        tile_n = min(tile_n, _round_up(num_nodes, 8))
        n_pad = _round_up(num_nodes, tile_n)

    a_hat = dense_adjacency_hat(edge_index, num_nodes, n_pad)
    x_pad = jnp.pad(x, ((0, n_pad - num_nodes), (0, p - input_dim)))
    w1_all, b1_all, w2_all, b2_all = _pad_and_stack_params(params, p)

    if mode == "fused":
        z = _encoder_fused_call(a_hat, x_pad, w1_all, b1_all, w2_all, b2_all)
    else:
        z = x_pad
        for l in range(num_layers):
            z = _gin_layer_tiled_call(a_hat, z, w1_all[l], b1_all[l],
                                      w2_all[l], b2_all[l], tile_n=tile_n)
    return z[:num_nodes, :hidden_dim]


# ---------------------------------------------------------------------------
# Pure-JAX reference (for correctness checking)
# ---------------------------------------------------------------------------
def encoder_reference(params, x, edge_index, num_nodes):
    src, dst = edge_index[0], edge_index[1]
    adj = jnp.zeros((num_nodes, num_nodes), jnp.float32).at[dst, src].add(1.0)
    adj = adj + jnp.eye(num_nodes, dtype=jnp.float32)
    z = x
    for (w1, b1, w2, b2) in params:
        h = adj @ z
        h1 = jax.nn.relu(h @ w1 + b1)
        h2 = h1 @ w2 + b2
        z = jax.nn.relu(h2)
    return z


def _check(z, z_ref):
    assert z.shape == z_ref.shape, (z.shape, z_ref.shape)
    assert bool(jnp.all(jnp.isfinite(z)))
    err = float(jnp.max(jnp.abs(z - z_ref)))
    scale = float(jnp.max(jnp.abs(z_ref))) + 1e-6
    assert err <= 0.05 * scale + 1e-2, f"max abs err {err} vs scale {scale}"


if __name__ == "__main__":
    key = jax.random.PRNGKey(0)

    # --- small graph -> fused all-layers kernel (A and z VMEM-resident) ------
    N, INPUT_DIM, HIDDEN_DIM, NUM_LAYERS, E = 16, 8, 32, 2, 48
    k_x, k_e, k_p, key = jax.random.split(key, 4)
    x = jax.random.normal(k_x, (N, INPUT_DIM), jnp.float32)
    edge_index = jax.random.randint(k_e, (2, E), 0, N, dtype=jnp.int32)
    params = init_encoder_params(k_p, INPUT_DIM, HIDDEN_DIM, NUM_LAYERS)

    z = encoder_forward(params, x, edge_index, num_nodes=N)
    jax.block_until_ready(z)
    _check(z, encoder_reference(params, x, edge_index, N))

    # --- larger graph -> per-layer row-tiled kernel path ---------------------
    N2, IN2, H2, L2, E2 = 512, 8, 32, 3, 4096
    k_x2, k_e2, k_p2, key = jax.random.split(key, 4)
    x2 = jax.random.normal(k_x2, (N2, IN2), jnp.float32)
    edge_index2 = jax.random.randint(k_e2, (2, E2), 0, N2, dtype=jnp.int32)
    params2 = init_encoder_params(k_p2, IN2, H2, L2)

    z2 = encoder_forward(params2, x2, edge_index2, num_nodes=N2,
                         mode="tiled", tile_n=256)
    jax.block_until_ready(z2)
    _check(z2, encoder_reference(params2, x2, edge_index2, N2))

    print("KERNEL_OK")
</pallas_src>

<mosaic_0001>
module attributes {stable_mosaic.version = 11 : i64} {
  func.func private @main(%arg0: i32) attributes {dimension_semantics = [#tpu.dimension_semantics<core_parallel>], iteration_bounds = array<i64: 2>, tpu.core_type = #tpu.core_type<sc_scalar_subcore>, window_params = []} {
    return
  }
}

module attributes {stable_mosaic.version = 11 : i64} {
  func.func private @main(%arg0: i32) attributes {dimension_semantics = [#tpu.dimension_semantics<core_parallel>], iteration_bounds = array<i64: 2>, tpu.core_type = #tpu.core_type<sc_scalar_subcore>, window_params = []} {
    return
  }
}

module attributes {stable_mosaic.version = 11 : i64} {
  func.func @_encoder_fused_kernel(%arg0: i32, %arg1: memref<16x16xbf16, #tpu.memory_space<vmem>>, %arg2: memref<16x128xf32, #tpu.memory_space<vmem>>, %arg3: memref<1x128x128xf32, #tpu.memory_space<vmem>>, %arg4: memref<1x1x128xf32, #tpu.memory_space<vmem>>, %arg5: memref<1x128x128xf32, #tpu.memory_space<vmem>>, %arg6: memref<1x1x128xf32, #tpu.memory_space<vmem>>, %arg7: memref<16x128xf32, #tpu.memory_space<vmem>>, %arg8: memref<16x128xf32, #tpu.memory_space<vmem>>) attributes {dimension_semantics = [#tpu.dimension_semantics<arbitrary>], iteration_bounds = array<i64: 2>, scalar_prefetch = 0 : i64, scratch_operands = 1 : i64, tpu.core_type = #tpu.core_type<tc>, window_params = [{pipeline_mode = #tpu.pipeline_mode<synchronous>, transform_indices = @transform_0, window_bounds = array<i64: 16, 16>}, {pipeline_mode = #tpu.pipeline_mode<synchronous>, transform_indices = @transform_1, window_bounds = array<i64: 16, 128>}, {transform_indices = @transform_2, window_bounds = array<i64: 1, 128, 128>}, {transform_indices = @transform_3, window_bounds = array<i64: 1, 1, 128>}, {transform_indices = @transform_4, window_bounds = array<i64: 1, 128, 128>}, {transform_indices = @transform_5, window_bounds = array<i64: 1, 1, 128>}, {pipeline_mode = #tpu.pipeline_mode<synchronous>, transform_indices = @transform_6, window_bounds = array<i64: 16, 128>}]} {
    %c0_i32 = arith.constant 0 : i32
    %0 = arith.cmpi eq, %arg0, %c0_i32 : i32
    %1 = arith.extui %0 : i1 to i32
    %c0_i32_0 = arith.constant 0 : i32
    %2 = arith.cmpi ne, %1, %c0_i32_0 : i32
    scf.if %2 {
      %c0_23 = arith.constant 0 : index
      %c0_24 = arith.constant 0 : index
      %29 = vector.load %arg2[%c0_23, %c0_24] : memref<16x128xf32, #tpu.memory_space<vmem>>, vector<16x128xf32>
      %c0_25 = arith.constant 0 : index
      %c0_26 = arith.constant 0 : index
      %30 = vector.load %arg8[%c0_25, %c0_26] : memref<16x128xf32, #tpu.memory_space<vmem>>, vector<16x128xf32>
      tpu.vector_store %arg8[%c0_25, %c0_26], %29 {strides = array<i32>} : memref<16x128xf32, #tpu.memory_space<vmem>>, vector<16x128xf32>,
    } else {
    }
    %c0 = arith.constant 0 : index
    %c0_1 = arith.constant 0 : index
    %3 = vector.load %arg8[%c0, %c0_1] : memref<16x128xf32, #tpu.memory_space<vmem>>, vector<16x128xf32>
    %c0_2 = arith.constant 0 : index
    %c0_3 = arith.constant 0 : index
    %4 = vector.load %arg1[%c0_2, %c0_3] : memref<16x16xbf16, #tpu.memory_space<vmem>>, vector<16x16xbf16>
    %5 = arith.truncf %3 : vector<16x128xf32> to vector<16x128xbf16>
    %cst = arith.constant dense<0.000000e+00> : vector<16x128xf32>
    %6 = tpu.matmul %4, %5, %cst {dimension_numbers = #tpu.dot_dimension_numbers<[1], [0], [0], [1], [0, 0, 1, 1], [], []>} : vector<16x16xbf16>, vector<16x128xbf16>, vector<16x128xf32> -> vector<16x128xf32>
    %c0_4 = arith.constant 0 : index
    %c0_5 = arith.constant 0 : index
    %c0_6 = arith.constant 0 : index
    %7 = vector.load %arg3[%c0_4, %c0_5, %c0_6] : memref<1x128x128xf32, #tpu.memory_space<vmem>>, vector<1x128x128xf32>
    %8 = vector.shape_cast %7 : vector<1x128x128xf32> to vector<128x128xf32>
    %cst_7 = arith.constant dense<0.000000e+00> : vector<16x128xf32>
    %9 = tpu.matmul %6, %8, %cst_7 {dimension_numbers = #tpu.dot_dimension_numbers<[1], [0], [0], [1], [0, 0, 1, 1], [], []>} : vector<16x128xf32>, vector<128x128xf32>, vector<16x128xf32> -> vector<16x128xf32>
    %c0_8 = arith.constant 0 : index
    %c0_9 = arith.constant 0 : index
    %c0_10 = arith.constant 0 : index
    %10 = vector.load %arg4[%c0_8, %c0_9, %c0_10] : memref<1x1x128xf32, #tpu.memory_space<vmem>>, vector<1x1x128xf32>
    %11 = vector.shape_cast %10 : vector<1x1x128xf32> to vector<1x128xf32>
    %12 = vector.broadcast %11 : vector<1x128xf32> to vector<16x128xf32>
    %13 = arith.addf %9, %12 : vector<16x128xf32>
    %cst_11 = arith.constant 0.000000e+00 : f32
    %14 = vector.broadcast %cst_11 : f32 to vector<16x128xf32>
    %15 = arith.maximumf %13, %14 : vector<16x128xf32>
    %c0_12 = arith.constant 0 : index
    %c0_13 = arith.constant 0 : index
    %c0_14 = arith.constant 0 : index
    %16 = vector.load %arg5[%c0_12, %c0_13, %c0_14] : memref<1x128x128xf32, #tpu.memory_space<vmem>>, vector<1x128x128xf32>
    %17 = vector.shape_cast %16 : vector<1x128x128xf32> to vector<128x128xf32>
    %cst_15 = arith.constant dense<0.000000e+00> : vector<16x128xf32>
    %18 = tpu.matmul %15, %17, %cst_15 {dimension_numbers = #tpu.dot_dimension_numbers<[1], [0], [0], [1], [0, 0, 1, 1], [], []>} : vector<16x128xf32>, vector<128x128xf32>, vector<16x128xf32> -> vector<16x128xf32>
    %c0_16 = arith.constant 0 : index
    %c0_17 = arith.constant 0 : index
    %c0_18 = arith.constant 0 : index
    %19 = vector.load %arg6[%c0_16, %c0_17, %c0_18] : memref<1x1x128xf32, #tpu.memory_space<vmem>>, vector<1x1x128xf32>
    %20 = vector.shape_cast %19 : vector<1x1x128xf32> to vector<1x128xf32>
    %21 = vector.broadcast %20 : vector<1x128xf32> to vector<16x128xf32>
    %22 = arith.addf %18, %21 : vector<16x128xf32>
    %cst_19 = arith.constant 0.000000e+00 : f32
    %23 = vector.broadcast %cst_19 : f32 to vector<16x128xf32>
    %24 = arith.maximumf %22, %23 : vector<16x128xf32>
    %c0_20 = arith.constant 0 : index
    %c0_21 = arith.constant 0 : index
    %25 = vector.load %arg8[%c0_20, %c0_21] : memref<16x128xf32, #tpu.memory_space<vmem>>, vector<16x128xf32>
    tpu.vector_store %arg8[%c0_20, %c0_21], %24 {strides = array<i32>} : memref<16x128xf32, #tpu.memory_space<vmem>>, vector<16x128xf32>,
    %c1_i32 = arith.constant 1 : i32
    %26 = arith.cmpi eq, %arg0, %c1_i32 : i32
    %27 = arith.extui %26 : i1 to i32
    %c0_i32_22 = arith.constant 0 : i32
    %28 = arith.cmpi ne, %27, %c0_i32_22 : i32
    scf.if %28 {
      %c0_23 = arith.constant 0 : index
      %c0_24 = arith.constant 0 : index
      %29 = vector.load %arg7[%c0_23, %c0_24] : memref<16x128xf32, #tpu.memory_space<vmem>>, vector<16x128xf32>
      tpu.vector_store %arg7[%c0_23, %c0_24], %24 {strides = array<i32>} : memref<16x128xf32, #tpu.memory_space<vmem>>, vector<16x128xf32>,
    } else {
    }
    return
  }
  func.func @transform_0(%arg0: i32) -> (i32, i32) {
    %c0_i32 = arith.constant 0 : i32
    %c0_i32_0 = arith.constant 0 : i32
    %c0_i32_1 = arith.constant 0 : i32
    return %c0_i32, %c0_i32_0 : i32, i32
  }
  func.func @transform_1(%arg0: i32) -> (i32, i32) {
    %c0_i32 = arith.constant 0 : i32
    %c0_i32_0 = arith.constant 0 : i32
    %c0_i32_1 = arith.constant 0 : i32
    return %c0_i32, %c0_i32_0 : i32, i32
  }
  func.func @transform_2(%arg0: i32) -> (i32, i32, i32) {
    %c0_i32 = arith.constant 0 : i32
    %c0_i32_0 = arith.constant 0 : i32
    %c0_i32_1 = arith.constant 0 : i32
    return %arg0, %c0_i32, %c0_i32_0 : i32, i32, i32
  }
  func.func @transform_3(%arg0: i32) -> (i32, i32, i32) {
    %c0_i32 = arith.constant 0 : i32
    %c0_i32_0 = arith.constant 0 : i32
    %c0_i32_1 = arith.constant 0 : i32
    return %arg0, %c0_i32, %c0_i32_0 : i32, i32, i32
  }
  func.func @transform_4(%arg0: i32) -> (i32, i32, i32) {
    %c0_i32 = arith.constant 0 : i32
    %c0_i32_0 = arith.constant 0 : i32
    %c0_i32_1 = arith.constant 0 : i32
    return %arg0, %c0_i32, %c0_i32_0 : i32, i32, i32
  }
  func.func @transform_5(%arg0: i32) -> (i32, i32, i32) {
    %c0_i32 = arith.constant 0 : i32
    %c0_i32_0 = arith.constant 0 : i32
    %c0_i32_1 = arith.constant 0 : i32
    return %arg0, %c0_i32, %c0_i32_0 : i32, i32, i32
  }
  func.func @transform_6(%arg0: i32) -> (i32, i32) {
    %c0_i32 = arith.constant 0 : i32
    %c0_i32_0 = arith.constant 0 : i32
    %c0_i32_1 = arith.constant 0 : i32
    return %c0_i32, %c0_i32_0 : i32, i32
  }
}

</mosaic_0001>

<llo_original>
// kernel: encoder_forward.1
$region0: #{encoder_forward.1}
  #allocation0 [shape = 'u32[]', space=smem, size = 0x4, offset = 0x4, fixed_abs, tag = 'smem constant byte address 0x4 - core index']
  #allocation1 [shape = 'u32[144,128]{1,0:T(1,128)}', space=vmem, size = 0x12000, scoped, tag = 'internal scratch']
  #allocation2 [shape = 'f32[16,128]{1,0:T(8,128)}', space=vmem, size = 0x2000, scoped, tag = 'scratch operand']
  %s0 = inlined_call_operand.vmem [shape: bf16[16,16], index: 0, kind: input, shape index: {}]
  %s1 = inlined_call_operand.vmem [shape: f32[16,128], index: 1, kind: input, shape index: {}]
  %s2 = inlined_call_operand.vmem [shape: f32[2,128,128], index: 2, kind: input, shape index: {}]
  %s3 = inlined_call_operand.vmem [shape: f32[2,1,128], index: 3, kind: input, shape index: {}]
  %s4 = inlined_call_operand.vmem [shape: f32[2,128,128], index: 4, kind: input, shape index: {}]
  %s5 = inlined_call_operand.vmem [shape: f32[2,1,128], index: 5, kind: input, shape index: {}]
  %s6 = inlined_call_operand.hbm [shape: f32[16,128], index: 6, kind: output, shape index: {}]
  %s7 = sld [smem:[#allocation0]]
  $region65: #{encoder_forward.1} parent=0
    _
  %s9 = ssub.s32 1, %s7
  %s10 = scalar_select 0, %s9, %s7
  $region1: #{encoder_forward.1} parent=0
    #allocation3 [shape = 'u8[8192]{0}', space=vmem, size = 0x2000, scoped, tag = 'output window, operand 0, single buffered']
    #allocation4 [shape = 's32[2]{0}', space=sflag, size = 0x8, scoped, tag = 'scoped memory for encoder_forward.1']
    %11 = vsyncpa [#allocation4], 0
    loop: start=0, step=1, limit=4
    $region2: #{encoder_forward.1} parent=1 // loop_pre_header
      _
    $region3: #{encoder_forward.1} parent=1 // loop_header
      %s13 = sphi 0, %s17
      %p14 = scmp.ge.s32.totalorder %s13, 4
      %s21 = sphi 0, %s21
      %s23 = sphi 0, %s21
      %s24 = sphi 0, %s23
      %s38 = sphi 0, %s24
      %s42 = sphi 0, %s42
      %s44 = sphi 0, %s42
      %s45 = sphi 0, %s44
      %s59 = sphi 0, %s45
      %s65 = sphi 0, %s67
      %s68 = sphi 0, %s65
      %s69 = sphi 0, %s68
      %s85 = sphi 0, %s69
      %s91 = sphi 0, %s93
      %s94 = sphi 0, %s91
      %s95 = sphi 0, %s94
      %s111 = sphi 0, %s95
      %s117 = sphi 0, %s119
      %s120 = sphi 0, %s117
      %s121 = sphi 0, %s120
      %s137 = sphi 0, %s121
      %s143 = sphi 0, %s145
      %s146 = sphi 0, %s143
      %s147 = sphi 0, %s146
      %s163 = sphi 0, %s147
      %s167 = sphi 0, %s167
      %s169 = sphi 0, %s167
      %s170 = sphi 0, %s169
      %s184 = sphi 0, %s170
    $region4: #{encoder_forward.1} parent=1 // loop_header_branch
      %16 = sbr.rel (%p14) target = $region8
    $region5: #{encoder_forward.1} parent=1 // loop_body
      %s18 = ssub.s32 %s13, 1
      %s19 = ssub.s32 %s13, 2
      %s20 = sadd.s32 %s13, 1
      %s22 = sadd.s32 %s21, 1
      %p25 = scmp.eq.s32.totalorder %s13, 1
      %p26 = scmp.ne.s32.totalorder %s21, %s23
      %p27 = scmp.eq.s32.totalorder %s13, 0
      %p28 = por %p26, %p27
      %p29 = scmp.ne.s32.totalorder %s21, %s23
      %p30 = scmp.eq.s32.totalorder %s18, 1
      %p31 = por %p29, %p30
      %p32 = scmp.ne.s32.totalorder %s23, %s24
      %p33 = scmp.eq.s32.totalorder %s18, 0
      %p34 = por %p32, %p33
      %p35 = scmp.ne.s32.totalorder %s23, %s24
      %p36 = scmp.eq.s32.totalorder %s19, 1
      %p37 = por %p35, %p36
      %p39 = scmp.ne.s32.totalorder %s24, %s38
      %p40 = scmp.eq.s32.totalorder %s19, 0
      %p41 = por %p39, %p40
      %s43 = sadd.s32 %s42, 1
      %p46 = scmp.eq.s32.totalorder %s13, 1
      %p47 = scmp.ne.s32.totalorder %s42, %s44
      %p48 = scmp.eq.s32.totalorder %s13, 0
      %p49 = por %p47, %p48
      %p50 = scmp.ne.s32.totalorder %s42, %s44
      %p51 = scmp.eq.s32.totalorder %s18, 1
      %p52 = por %p50, %p51
      %p53 = scmp.ne.s32.totalorder %s44, %s45
      %p54 = scmp.eq.s32.totalorder %s18, 0
      %p55 = por %p53, %p54
      %p56 = scmp.ne.s32.totalorder %s44, %s45
      %p57 = scmp.eq.s32.totalorder %s19, 1
      %p58 = por %p56, %p57
      %p60 = scmp.ne.s32.totalorder %s45, %s59
      %p61 = scmp.eq.s32.totalorder %s19, 0
      %p62 = por %p60, %p61
      %s63 = ssub.s32 %s13, %s20
      %p64 = scmp.eq.s32.totalorder %s63, 0
      %s66 = sadd.s32 %s65, 1
      %s67 = scalar_select %p64, %s65, %s66
      %p70 = pneg %p64
      %p71 = scmp.eq.s32.totalorder %s13, 1
      %p72 = por %p70, %p71
      %p73 = scmp.ne.s32.totalorder %s65, %s68
      %p74 = scmp.eq.s32.totalorder %s13, 0
      %p75 = por %p73, %p74
      %p76 = scmp.ne.s32.totalorder %s65, %s68
      %p77 = scmp.eq.s32.totalorder %s18, 1
      %p78 = por %p76, %p77
      %p79 = scmp.ne.s32.totalorder %s68, %s69
      %p80 = scmp.eq.s32.totalorder %s18, 0
      %p81 = por %p79, %p80
      %p82 = scmp.ne.s32.totalorder %s68, %s69
      %p83 = scmp.eq.s32.totalorder %s19, 1
      %p84 = por %p82, %p83
      %p86 = scmp.ne.s32.totalorder %s69, %s85
      %p87 = scmp.eq.s32.totalorder %s19, 0
      %p88 = por %p86, %p87
      %s89 = ssub.s32 %s13, %s20
      %p90 = scmp.eq.s32.totalorder %s89, 0
      %s92 = sadd.s32 %s91, 1
      %s93 = scalar_select %p90, %s91, %s92
      %p96 = pneg %p90
      %p97 = scmp.eq.s32.totalorder %s13, 1
      %p98 = por %p96, %p97
      %p99 = scmp.ne.s32.totalorder %s91, %s94
      %p100 = scmp.eq.s32.totalorder %s13, 0
      %p101 = por %p99, %p100
      %p102 = scmp.ne.s32.totalorder %s91, %s94
      %p103 = scmp.eq.s32.totalorder %s18, 1
      %p104 = por %p102, %p103
      %p105 = scmp.ne.s32.totalorder %s94, %s95
      %p106 = scmp.eq.s32.totalorder %s18, 0
      %p107 = por %p105, %p106
      %p108 = scmp.ne.s32.totalorder %s94, %s95
      %p109 = scmp.eq.s32.totalorder %s19, 1
      %p110 = por %p108, %p109
      %p112 = scmp.ne.s32.totalorder %s95, %s111
      %p113 = scmp.eq.s32.totalorder %s19, 0
      %p114 = por %p112, %p113
      %s115 = ssub.s32 %s13, %s20
      %p116 = scmp.eq.s32.totalorder %s115, 0
      %s118 = sadd.s32 %s117, 1
      %s119 = scalar_select %p116, %s117, %s118
      %p122 = pneg %p116
      %p123 = scmp.eq.s32.totalorder %s13, 1
      %p124 = por %p122, %p123
      %p125 = scmp.ne.s32.totalorder %s117, %s120
      %p126 = scmp.eq.s32.totalorder %s13, 0
      %p127 = por %p125, %p126
      %p128 = scmp.ne.s32.totalorder %s117, %s120
      %p129 = scmp.eq.s32.totalorder %s18, 1
      %p130 = por %p128, %p129
      %p131 = scmp.ne.s32.totalorder %s120, %s121
      %p132 = scmp.eq.s32.totalorder %s18, 0
      %p133 = por %p131, %p132
      %p134 = scmp.ne.s32.totalorder %s120, %s121
      %p135 = scmp.eq.s32.totalorder %s19, 1
      %p136 = por %p134, %p135
      %p138 = scmp.ne.s32.totalorder %s121, %s137
      %p139 = scmp.eq.s32.totalorder %s19, 0
      %p140 = por %p138, %p139
      %s141 = ssub.s32 %s13, %s20
      %p142 = scmp.eq.s32.totalorder %s141, 0
      %s144 = sadd.s32 %s143, 1
      %s145 = scalar_select %p142, %s143, %s144
      %p148 = pneg %p142
      %p149 = scmp.eq.s32.totalorder %s13, 1
      %p150 = por %p148, %p149
      %p151 = scmp.ne.s32.totalorder %s143, %s146
      %p152 = scmp.eq.s32.totalorder %s13, 0
      %p153 = por %p151, %p152
      %p154 = scmp.ne.s32.totalorder %s143, %s146
      %p155 = scmp.eq.s32.totalorder %s18, 1
      %p156 = por %p154, %p155
      %p157 = scmp.ne.s32.totalorder %s146, %s147
      %p158 = scmp.eq.s32.totalorder %s18, 0
      %p159 = por %p157, %p158
      %p160 = scmp.ne.s32.totalorder %s146, %s147
      %p161 = scmp.eq.s32.totalorder %s19, 1
      %p162 = por %p160, %p161
      %p164 = scmp.ne.s32.totalorder %s147, %s163
      %p165 = scmp.eq.s32.totalorder %s19, 0
      %p166 = por %p164, %p165
      %s168 = sadd.s32 %s167, 1
      %p171 = scmp.eq.s32.totalorder %s13, 1
      %p172 = scmp.ne.s32.totalorder %s167, %s169
      %p173 = scmp.eq.s32.totalorder %s13, 0
      %p174 = por %p172, %p173
      %p175 = scmp.ne.s32.totalorder %s167, %s169
      %p176 = scmp.eq.s32.totalorder %s18, 1
      %p177 = por %p175, %p176
      %p178 = scmp.ne.s32.totalorder %s169, %s170
      %p179 = scmp.eq.s32.totalorder %s18, 0
      %p180 = por %p178, %p179
      %p181 = scmp.ne.s32.totalorder %s169, %s170
      %p182 = scmp.eq.s32.totalorder %s19, 1
      %p183 = por %p181, %p182
      %p185 = scmp.ne.s32.totalorder %s170, %s184
      %p186 = scmp.eq.s32.totalorder %s19, 0
      %p187 = por %p185, %p186
      %p188 = scmp.le.s32.totalorder 1, %s13
      %p189 = scmp.lt.s32.totalorder %s13, 3
      %p190 = pnand %p188, %p189
      %p191 = pneg %p190
      // Predicated region
      $region9: #{encoder_forward.1} parent=5 // pred_check
        _
      $region10: #{encoder_forward.1} parent=5 // pred_check_branch
        %193 = sbr.rel (%p190) target = $region12
      $region11: #{encoder_forward.1} parent=5 // pred_region
        %s194 = ssub.s32 %s13, 1
        // Predicated region
        $region13: #{encoder_forward.1} parent=11 // pred_check
          %p195 = pneg %p34
        $region14: #{encoder_forward.1} parent=11 // pred_check_branch
          %197 = sbr.rel (%p195) target = $region16
        $region15: #{encoder_forward.1} parent=11 // pred_region
          _
        $region16: #{encoder_forward.1} parent=11 // pred_fallthru
          _
        // Predicated region
        $region17: #{encoder_forward.1} parent=11 // pred_check
          %p198 = pneg %p55
        $region18: #{encoder_forward.1} parent=11 // pred_check_branch
          %200 = sbr.rel (%p198) target = $region20
        $region19: #{encoder_forward.1} parent=11 // pred_region
          _
        $region20: #{encoder_forward.1} parent=11 // pred_fallthru
          _
      $region12: #{encoder_forward.1} parent=5 // pred_fallthru
        _
      %p201 = scmp.lt.s32.totalorder %s13, 2
      // Predicated region
      $region21: #{encoder_forward.1} parent=5 // pred_check
        %p202 = pneg %p201
      $region22: #{encoder_forward.1} parent=5 // pred_check_branch
        %204 = sbr.rel (%p202) target = $region24
      $region23: #{encoder_forward.1} parent=5 // pred_region
        // Predicated region
        $region25: #{encoder_forward.1} parent=23 // pred_check
          %p205 = pneg %p75
        $region26: #{encoder_forward.1} parent=23 // pred_check_branch
          %207 = sbr.rel (%p205) target = $region28
        $region27: #{encoder_forward.1} parent=23 // pred_region
          %p208 = scmp.lt.s32.totalorder %s13, 1
          %s209 = scalar_select %p208, %s13, 1
          %s210 = smul.addr %s209, 16
          %s211 = smul.addr %s210, 8
          %s212 = scalar_lea.vmem %s2, %s211
        $region28: #{encoder_forward.1} parent=23 // pred_fallthru
          _
        // Predicated region
        $region29: #{encoder_forward.1} parent=23 // pred_check
          %p213 = pneg %p101
        $region30: #{encoder_forward.1} parent=23 // pred_check_branch
          %215 = sbr.rel (%p213) target = $region32
        $region31: #{encoder_forward.1} parent=23 // pred_region
          %p216 = scmp.lt.s32.totalorder %s13, 1
          %s217 = scalar_select %p216, %s13, 1
          %s218 = scalar_lea.vmem %s3, %s217
        $region32: #{encoder_forward.1} parent=23 // pred_fallthru
          _
        // Predicated region
        $region33: #{encoder_forward.1} parent=23 // pred_check
          %p219 = pneg %p127
        $region34: #{encoder_forward.1} parent=23 // pred_check_branch
          %221 = sbr.rel (%p219) target = $region36
        $region35: #{encoder_forward.1} parent=23 // pred_region
          %p222 = scmp.lt.s32.totalorder %s13, 1
          %s223 = scalar_select %p222, %s13, 1
          %s224 = smul.addr %s223, 16
          %s225 = smul.addr %s224, 8
          %s226 = scalar_lea.vmem %s4, %s225
        $region36: #{encoder_forward.1} parent=23 // pred_fallthru
          _
        // Predicated region
        $region37: #{encoder_forward.1} parent=23 // pred_check
          %p227 = pneg %p153
        $region38: #{encoder_forward.1} parent=23 // pred_check_branch
          %229 = sbr.rel (%p227) target = $region40
        $region39: #{encoder_forward.1} parent=23 // pred_region
          %p230 = scmp.lt.s32.totalorder %s13, 1
          %s231 = scalar_select %p230, %s13, 1
          %s232 = scalar_lea.vmem %s5, %s231
        $region40: #{encoder_forward.1} parent=23 // pred_fallthru
          _
      $region24: #{encoder_forward.1} parent=5 // pred_fallthru
        _
      %p233 = scmp.le.s32.totalorder 1, %s13
      %p234 = scmp.lt.s32.totalorder %s13, 3
      %p235 = pnand %p233, %p234
      %p236 = pneg %p235
      // Predicated region
      $region41: #{encoder_forward.1} parent=5 // pred_check
        _
      $region42: #{encoder_forward.1} parent=5 // pred_check_branch
        %238 = sbr.rel (%p235) target = $region44
      $region43: #{encoder_forward.1} parent=5 // pred_region
        %s239 = ssub.s32 %s13, 1
        %p240 = pneg %p34
        %p241 = pneg %p31
        %p242 = pneg %p55
        %p243 = pneg %p52
        %p244 = scmp.lt.s32.totalorder %s18, 1
        %s245 = scalar_select %p244, %s18, 1
        %s246 = smul.addr %s245, 16
        %s247 = smul.addr %s246, 8
        %s248 = scalar_lea.vmem %s2, %s247
        %p249 = pneg %p81
        %p250 = pneg %p78
        %p251 = scmp.lt.s32.totalorder %s18, 1
        %s252 = scalar_select %p251, %s18, 1
        %s253 = scalar_lea.vmem %s3, %s252
        %p254 = pneg %p107
        %p255 = pneg %p104
        %p256 = scmp.lt.s32.totalorder %s18, 1
        %s257 = scalar_select %p256, %s18, 1
        %s258 = smul.addr %s257, 16
        %s259 = smul.addr %s258, 8
        %s260 = scalar_lea.vmem %s4, %s259
        %p261 = pneg %p133
        %p262 = pneg %p130
        %p263 = scmp.lt.s32.totalorder %s18, 1
        %s264 = scalar_select %p263, %s18, 1
        %s265 = scalar_lea.vmem %s5, %s264
        %p266 = pneg %p159
        %p267 = pneg %p156
        %p268 = pneg %p180
        %p269 = pneg %p177
        %p270 = scmp.lt.s32.totalorder %s18, 1
        %s271 = scalar_select %p270, %s18, 1
        %s272 = smul.addr %s271, 16
        %s273 = smul.addr %s272, 8
        %s274 = scalar_lea.vmem %s2, %s273
        %p275 = scmp.lt.s32.totalorder %s18, 1
        %s276 = scalar_select %p275, %s18, 1
        %s277 = scalar_lea.vmem %s3, %s276
        %p278 = scmp.lt.s32.totalorder %s18, 1
        %s279 = scalar_select %p278, %s18, 1
        %s280 = smul.addr %s279, 16
        %s281 = smul.addr %s280, 8
        %s282 = scalar_lea.vmem %s4, %s281
        %p283 = scmp.lt.s32.totalorder %s18, 1
        %s284 = scalar_select %p283, %s18, 1
        %s285 = scalar_lea.vmem %s5, %s284
        %p287 = scmp.eq.s32.totalorder %s18, 0
        // Predicated region
        $region45: #{encoder_forward.1} parent=43 // pred_check
          %p288 = pneg %p287
        $region46: #{encoder_forward.1} parent=43 // pred_check_branch
          %290 = sbr.rel (%p288) target = $region48
        $region47: #{encoder_forward.1} parent=43 // pred_region
          %v291 = vld [vmem:[%s1] sm:$0xff]
          %v292 = vld [vmem:[%s1 + $0x8] sm:$0xff]
          %293 = vst [vmem:[#allocation2] sm:$0xff] %v291
          %294 = vst [vmem:[#allocation2 + $0x8] sm:$0xff] %v292
        $region48: #{encoder_forward.1} parent=43 // pred_fallthru
          _
        %v295 = vld [vmem:[#allocation2] sm:$0xff]
        %v296 = vld [vmem:[#allocation2 + $0x8] sm:$0xff]
        %v297 = vld [vmem:[%s0] sm:$0xf]
        %v298 = vld [vmem:[%s0 + $0x4] sm:$0xf]
        %v299 = vpack.c.bf16 %v296, %v295
        %v302 = vunpack.c.l.b16 %v297
        %v303 = vunpack.c.l.b16 %v298
        %v304 = vpack.c.b16 %v303, %v302
        %vm305 = vcmask 130048
        %v307 = vsel %vm305, %v304, 0
        %309 = vmatprep.subr.bf16.mxu0 0
        %310 = vmatpush1.bf16.msra.mxu0 0
        %311 = vmatprep.subr.bf16.mxu0 0
        %312 = vmatpush1.bf16.msra.mxu0 0
        %313 = vmatprep.subr.bf16.mxu0 0
        %314 = vmatpush1.bf16.msra.mxu0 0
        %315 = vmatprep.subr.bf16.mxu0 0
        %316 = vmatpush1.bf16.msra.mxu0 0
        %317 = vmatprep.subr.bf16.mxu0 0
        %318 = vmatpush1.bf16.msra.mxu0 0
        %319 = vmatprep.subr.bf16.mxu0 0
        %320 = vmatpush1.bf16.msra.mxu0 0
        %321 = vmatprep.subr.bf16.mxu0 0
        %322 = vmatpush1.bf16.msra.mxu0 0
        %323 = vmatprep.subr.bf16.mxu0 0
        %324 = vmatpush1.bf16.msra.mxu0 %v299
        %325 = vmatprep.subr.bf16.mxu0 0
        %326 = vmatpush2.bf16.msra.mxu0 0
        %327 = vmatprep.subr.bf16.mxu0 0
        %328 = vmatpush2.bf16.msra.mxu0 0
        %329 = vmatprep.subr.bf16.mxu0 0
        %330 = vmatpush2.bf16.msra.mxu0 0
        %331 = vmatprep.subr.bf16.mxu0 0
        %332 = vmatpush2.bf16.msra.mxu0 0
        %333 = vmatprep.subr.bf16.mxu0 0
        %334 = vmatpush2.bf16.msra.mxu0 0
        %335 = vmatprep.subr.bf16.mxu0 0
        %336 = vmatpush2.bf16.msra.mxu0 0
        %337 = vmatprep.subr.bf16.mxu0 0
        %338 = vmatpush2.bf16.msra.mxu0 0
        %339 = vmatprep.subr.bf16.mxu0 0
        %340 = vmatpush2.bf16.msra.mxu0 0
        %341 = vmatprep.mubr.bf16.mxu0 0
        %342 = vmatmul.mubr.bf16.gmra.mxu0 %v307
        %v343 = vpop.f32.mrf.mxu0
        %v344 = vadd.f32 0.0, %v343
        %v345 = vpop.f32.mrf.mxu0
        %v346 = vpop.f32.mrf.mxu0
        %v347 = vadd.f32 0.0, %v346
        %v348 = vpop.f32.mrf.mxu0
        %349 = vdwg.mxu0
        %v350 = vld [vmem:[%s274] sm:$0xff]
        %v351 = vld [vmem:[%s274 + $0x8] sm:$0xff]
        %v352 = vld [vmem:[%s274 + $0x10] sm:$0xff]
        %v353 = vld [vmem:[%s274 + $0x18] sm:$0xff]
        %v354 = vld [vmem:[%s274 + $0x20] sm:$0xff]
        %v355 = vld [vmem:[%s274 + $0x28] sm:$0xff]
        %v356 = vld [vmem:[%s274 + $0x30] sm:$0xff]
        %v357 = vld [vmem:[%s274 + $0x38] sm:$0xff]
        %v358 = vld [vmem:[%s274 + $0x40] sm:$0xff]
        %v359 = vld [vmem:[%s274 + $0x48] sm:$0xff]
        %v360 = vld [vmem:[%s274 + $0x50] sm:$0xff]
        %v361 = vld [vmem:[%s274 + $0x58] sm:$0xff]
        %v362 = vld [vmem:[%s274 + $0x60] sm:$0xff]
        %v363 = vld [vmem:[%s274 + $0x68] sm:$0xff]
        %v364 = vld [vmem:[%s274 + $0x70] sm:$0xff]
        %v365 = vld [vmem:[%s274 + $0x78] sm:$0xff]
        %v366 = vld [vmem:[%s277] sm:$0x1]
        %v368 = vlaneseq
        %v369 = vshrl.u32 %v368, 7
        %v370 = vsub.s32 0, %v369
        %v371 = vrot.slane %v366, %v370
        %373 = vmatprep.subr.mxu0 0.0
        %374 = vmatpush1.msra.mxu0 %v365
        %375 = vmatprep.subr.mxu0 0.0
        %376 = vmatpush1.msra.mxu0 %v364
        %377 = vmatprep.subr.mxu0 0.0
        %378 = vmatpush1.msra.mxu0 %v363
        %379 = vmatprep.subr.mxu0 0.0
        %380 = vmatpush1.msra.mxu0 %v362
        %381 = vmatprep.subr.mxu0 0.0
        %382 = vmatpush1.msra.mxu0 %v361
        %383 = vmatprep.subr.mxu0 0.0
        %384 = vmatpush1.msra.mxu0 %v360
        %385 = vmatprep.subr.mxu0 0.0
        %386 = vmatpush1.msra.mxu0 %v359
        %387 = vmatprep.subr.mxu0 0.0
        %388 = vmatpush1.msra.mxu0 %v358
        %389 = vmatprep.subr.mxu0 0.0
        %390 = vmatpush1.msra.mxu0 %v357
        %391 = vmatprep.subr.mxu0 0.0
        %392 = vmatpush1.msra.mxu0 %v356
        %393 = vmatprep.subr.mxu0 0.0
        %394 = vmatpush1.msra.mxu0 %v355
        %395 = vmatprep.subr.mxu0 0.0
        %396 = vmatpush1.msra.mxu0 %v354
        %397 = vmatprep.subr.mxu0 0.0
        %398 = vmatpush1.msra.mxu0 %v353
        %399 = vmatprep.subr.mxu0 0.0
        %400 = vmatpush1.msra.mxu0 %v352
        %401 = vmatprep.subr.mxu0 0.0
        %402 = vmatpush1.msra.mxu0 %v351
        %403 = vmatprep.subr.mxu0 0.0
        %404 = vmatpush1.msra.mxu0 %v350
        %405 = vmatprep.subr.mxu0 0.0
        %406 = vmatpush2.msra.mxu0 0.0
        %407 = vmatprep.subr.mxu0 0.0
        %408 = vmatpush2.msra.mxu0 0.0
        %409 = vmatprep.subr.mxu0 0.0
        %410 = vmatpush2.msra.mxu0 0.0
        %411 = vmatprep.subr.mxu0 0.0
        %412 = vmatpush2.msra.mxu0 0.0
        %413 = vmatprep.subr.mxu0 0.0
        %414 = vmatpush2.msra.mxu0 0.0
        %415 = vmatprep.subr.mxu0 0.0
        %416 = vmatpush2.msra.mxu0 0.0
        %417 = vmatprep.subr.mxu0 0.0
        %418 = vmatpush2.msra.mxu0 0.0
        %419 = vmatprep.subr.mxu0 0.0
        %420 = vmatpush2.msra.mxu0 0.0
        %421 = vmatprep.subr.mxu0 0.0
        %422 = vmatpush2.msra.mxu0 0.0
        %423 = vmatprep.subr.mxu0 0.0
        %424 = vmatpush2.msra.mxu0 0.0
        %425 = vmatprep.subr.mxu0 0.0
        %426 = vmatpush2.msra.mxu0 0.0
        %427 = vmatprep.subr.mxu0 0.0
        %428 = vmatpush2.msra.mxu0 0.0
        %429 = vmatprep.subr.mxu0 0.0
        %430 = vmatpush2.msra.mxu0 0.0
        %431 = vmatprep.subr.mxu0 0.0
        %432 = vmatpush2.msra.mxu0 0.0
        %433 = vmatprep.subr.mxu0 0.0
        %434 = vmatpush2.msra.mxu0 0.0
        %435 = vmatprep.subr.mxu0 0.0
        %436 = vmatpush2.msra.mxu0 0.0
        %437 = vmatprep.mubr.f32.mxu0 0.0
        %438 = vmatmul.mubr.f32.gmra.mxu0 %v344
        %v439 = vpop.f32.mrf.mxu0
        %v440 = vadd.f32 %v371, %v439
        %v441 = vpop.f32.mrf.mxu0
        %442 = vmatprep.mubr.f32.mxu0 0.0
        %443 = vmatmul.mubr.f32.gmra.mxu0 %v347
        %v444 = vpop.f32.mrf.mxu0
        %v445 = vadd.f32 %v371, %v444
        %v446 = vpop.f32.mrf.mxu0
        %447 = vdwg.mxu0
        %v448 = vmax.f32 %v440, 0.0
        %v449 = vmax.f32 %v445, 0.0
        %v450 = vld [vmem:[%s282] sm:$0xff]
        %v451 = vld [vmem:[%s282 + $0x8] sm:$0xff]
        %v452 = vld [vmem:[%s282 + $0x10] sm:$0xff]
        %v453 = vld [vmem:[%s282 + $0x18] sm:$0xff]
        %v454 = vld [vmem:[%s282 + $0x20] sm:$0xff]
        %v455 = vld [vmem:[%s282 + $0x28] sm:$0xff]
        %v456 = vld [vmem:[%s282 + $0x30] sm:$0xff]
        %v457 = vld [vmem:[%s282 + $0x38] sm:$0xff]
        %v458 = vld [vmem:[%s282 + $0x40] sm:$0xff]
        %v459 = vld [vmem:[%s282 + $0x48] sm:$0xff]
        %v460 = vld [vmem:[%s282 + $0x50] sm:$0xff]
        %v461 = vld [vmem:[%s282 + $0x58] sm:$0xff]
        %v462 = vld [vmem:[%s282 + $0x60] sm:$0xff]
        %v463 = vld [vmem:[%s282 + $0x68] sm:$0xff]
        %v464 = vld [vmem:[%s282 + $0x70] sm:$0xff]
        %v465 = vld [vmem:[%s282 + $0x78] sm:$0xff]
        %v466 = vld [vmem:[%s285] sm:$0x1]
        %v468 = vlaneseq
        %v469 = vshrl.u32 %v468, 7
        %v470 = vsub.s32 0, %v469
        %v471 = vrot.slane %v466, %v470
        %473 = vmatprep.subr.mxu0 0.0
        %474 = vmatpush1.msra.mxu0 %v465
        %475 = vmatprep.subr.mxu0 0.0
        %476 = vmatpush1.msra.mxu0 %v464
        %477 = vmatprep.subr.mxu0 0.0
        %478 = vmatpush1.msra.mxu0 %v463
        %479 = vmatprep.subr.mxu0 0.0
        %480 = vmatpush1.msra.mxu0 %v462
        %481 = vmatprep.subr.mxu0 0.0
        %482 = vmatpush1.msra.mxu0 %v461
        %483 = vmatprep.subr.mxu0 0.0
        %484 = vmatpush1.msra.mxu0 %v460
        %485 = vmatprep.subr.mxu0 0.0
        %486 = vmatpush1.msra.mxu0 %v459
        %487 = vmatprep.subr.mxu0 0.0
        %488 = vmatpush1.msra.mxu0 %v458
        %489 = vmatprep.subr.mxu0 0.0
        %490 = vmatpush1.msra.mxu0 %v457
        %491 = vmatprep.subr.mxu0 0.0
        %492 = vmatpush1.msra.mxu0 %v456
        %493 = vmatprep.subr.mxu0 0.0
        %494 = vmatpush1.msra.mxu0 %v455
        %495 = vmatprep.subr.mxu0 0.0
        %496 = vmatpush1.msra.mxu0 %v454
        %497 = vmatprep.subr.mxu0 0.0
        %498 = vmatpush1.msra.mxu0 %v453
        %499 = vmatprep.subr.mxu0 0.0
        %500 = vmatpush1.msra.mxu0 %v452
        %501 = vmatprep.subr.mxu0 0.0
        %502 = vmatpush1.msra.mxu0 %v451
        %503 = vmatprep.subr.mxu0 0.0
        %504 = vmatpush1.msra.mxu0 %v450
        %505 = vmatprep.subr.mxu0 0.0
        %506 = vmatpush2.msra.mxu0 0.0
        %507 = vmatprep.subr.mxu0 0.0
        %508 = vmatpush2.msra.mxu0 0.0
        %509 = vmatprep.subr.mxu0 0.0
        %510 = vmatpush2.msra.mxu0 0.0
        %511 = vmatprep.subr.mxu0 0.0
        %512 = vmatpush2.msra.mxu0 0.0
        %513 = vmatprep.subr.mxu0 0.0
        %514 = vmatpush2.msra.mxu0 0.0
        %515 = vmatprep.subr.mxu0 0.0
        %516 = vmatpush2.msra.mxu0 0.0
        %517 = vmatprep.subr.mxu0 0.0
        %518 = vmatpush2.msra.mxu0 0.0
        %519 = vmatprep.subr.mxu0 0.0
        %520 = vmatpush2.msra.mxu0 0.0
        %521 = vmatprep.subr.mxu0 0.0
        %522 = vmatpush2.msra.mxu0 0.0
        %523 = vmatprep.subr.mxu0 0.0
        %524 = vmatpush2.msra.mxu0 0.0
        %525 = vmatprep.subr.mxu0 0.0
        %526 = vmatpush2.msra.mxu0 0.0
        %527 = vmatprep.subr.mxu0 0.0
        %528 = vmatpush2.msra.mxu0 0.0
        %529 = vmatprep.subr.mxu0 0.0
        %530 = vmatpush2.msra.mxu0 0.0
        %531 = vmatprep.subr.mxu0 0.0
        %532 = vmatpush2.msra.mxu0 0.0
        %533 = vmatprep.subr.mxu0 0.0
        %534 = vmatpush2.msra.mxu0 0.0
        %535 = vmatprep.subr.mxu0 0.0
        %536 = vmatpush2.msra.mxu0 0.0
        %537 = vmatprep.mubr.f32.mxu0 0.0
        %538 = vmatmul.mubr.f32.gmra.mxu0 %v448
        %v539 = vpop.f32.mrf.mxu0
        %v540 = vadd.f32 %v471, %v539
        %v541 = vpop.f32.mrf.mxu0
        %542 = vmatprep.mubr.f32.mxu0 0.0
        %543 = vmatmul.mubr.f32.gmra.mxu0 %v449
        %v544 = vpop.f32.mrf.mxu0
        %v545 = vadd.f32 %v471, %v544
        %v546 = vpop.f32.mrf.mxu0
        %547 = vdwg.mxu0
        %v548 = vmax.f32 %v540, 0.0
        %v549 = vmax.f32 %v545, 0.0
        %550 = vst [vmem:[#allocation2] sm:$0xff] %v548
        %551 = vst [vmem:[#allocation2 + $0x8] sm:$0xff] %v549
        %p552 = scmp.eq.s32.totalorder %s18, 1
        // Predicated region
        $region49: #{encoder_forward.1} parent=43 // pred_check
          %p553 = pneg %p552
        $region50: #{encoder_forward.1} parent=43 // pred_check_branch
          %555 = sbr.rel (%p553) target = $region52
        $region51: #{encoder_forward.1} parent=43 // pred_region
          %556 = vst [vmem:[#allocation3] sm:$0xff] %v548
          %557 = vst [vmem:[#allocation3 + $0x8] sm:$0xff] %v549
        $region52: #{encoder_forward.1} parent=43 // pred_fallthru
          _
        // Predicated region
        $region53: #{encoder_forward.1} parent=43 // pred_check
          %p558 = pneg %p177
        $region54: #{encoder_forward.1} parent=43 // pred_check_branch
          %560 = sbr.rel (%p558) target = $region56
        $region55: #{encoder_forward.1} parent=43 // pred_region
          %s562 = ssub.s32 256, 256
          %563 = vsyncadd [#allocation4], %s562
          %s564 = sshll.u32 [#allocation3], 4
          %s565 = int_to_ptr.vmem [resolvable:$true] %s564
          %570 = dma.vmem_to_hbm [thread:$0]  %s565, 256, %s6, [#allocation4], 128, 128, 8
        $region56: #{encoder_forward.1} parent=43 // pred_fallthru
          _
        // Predicated region
        $region57: #{encoder_forward.1} parent=43 // pred_check
          %p571 = pneg %p177
        $region58: #{encoder_forward.1} parent=43 // pred_check_branch
          %573 = sbr.rel (%p571) target = $region60
        $region59: #{encoder_forward.1} parent=43 // pred_region
          %574 = dma.done [#allocation4], 256
        $region60: #{encoder_forward.1} parent=43 // pred_fallthru
          _
      $region44: #{encoder_forward.1} parent=5 // pred_fallthru
        _
      %p575 = scmp.le.s32.totalorder 2, %s13
      // Predicated region
      $region61: #{encoder_forward.1} parent=5 // pred_check
        %p576 = pneg %p575
      $region62: #{encoder_forward.1} parent=5 // pred_check_branch
        %578 = sbr.rel (%p576) target = $region64
      $region63: #{encoder_forward.1} parent=5 // pred_region
        %s579 = ssub.s32 %s13, 2
      $region64: #{encoder_forward.1} parent=5 // pred_fallthru
        _
    $region6: #{encoder_forward.1} parent=1 // loop_footer
      %s17 = sadd.s32 1, %s13
    $region7: #{encoder_forward.1} parent=1 // loop_footer_branch
      %12 = sbr.rel target = $region3
    $region8: #{encoder_forward.1} parent=1 // loop_exit
      _
    %580 = vsyncpa [#allocation4], 1
    %s581 = scalar_lea.sflag [#allocation4], 1
    %582 = vsyncpa %s581, 1

</llo_original>
